<compile_context>
chip_gen: v7x
topology: tpu7x:2x2x1
jax: 0.10.0
libtpu: 0.0.40
codegen_flags: <defaults>
</compile_context>

<pallas_src>
import functools

import jax
import jax.numpy as jnp
from jax.experimental import pallas as pl
from jax.experimental.pallas import tpu as pltpu

EPS = 1e-5


# ----------------------------------------------------------------------------
# Kernels
# ----------------------------------------------------------------------------
def _conv_bn_stats_kernel(body_ref, top_ref, bot_ref, w_ref, *rest, pre_act):
    """One row-tile of: [optional folded-BN + ReLU] -> 3x3 conv -> stats.

    body_ref : (1, TH, 1, W*Cin)   rows of this tile
    top_ref  : (1, 1, 1, W*Cin)    row above the tile (garbage if r == 0)
    bot_ref  : (1, 1, 1, W*Cin)    row below the tile (garbage if r == last)
    w_ref    : (3*W*Cin, W*Cout)   banded im2col weight (built in the wrapper)
    if pre_act: sc_ref, sh_ref : (1, W*Cin) folded BN scale/shift of the
    previous layer, applied (with ReLU) before the conv.
    Outputs: y_ref (1, TH, 1, W*Cout) f32, sum_ref/sq_ref (1, W*Cout) f32
    per-(w, c) partial sums accumulated across the whole grid.
    """
    if pre_act:
        sc_ref, sh_ref, y_ref, sum_ref, sq_ref = rest
    else:
        y_ref, sum_ref, sq_ref = rest

    th = body_ref.shape[1]
    wc_in = body_ref.shape[3]
    wc_out = y_ref.shape[3]

    r = pl.program_id(1)

    body = body_ref[...].reshape(th, wc_in)
    top = top_ref[...].reshape(1, wc_in)
    bot = bot_ref[...].reshape(1, wc_in)

    if pre_act:
        # Previous BN folded to a single scale/shift (+ ReLU), in f32.
        sc = sc_ref[...]
        sh = sh_ref[...]
        act = lambda v: jnp.maximum(v.astype(jnp.float32) * sc + sh, 0.0)
        body, top, bot = act(body), act(top), act(bot)

    # SAME padding in H: zero the halo rows that fall outside the image.
    top = top * (r > 0).astype(top.dtype)
    bot = bot * (r < pl.num_programs(1) - 1).astype(bot.dtype)

    # (TH+2, W*Cin) row window, cast to the MXU dtype once.
    win = jnp.concatenate([top, body, bot], axis=0).astype(w_ref.dtype)

    # One matmul per tile: the three dy-shifted row windows are laid out
    # lane-dense along K; the banded weight handles the dx taps and the
    # SAME padding along W (zero bands).
    lhs = jnp.concatenate([win[0:th], win[1:th + 1], win[2:th + 2]], axis=1)
    y = jnp.dot(lhs, w_ref[...],
                preferred_element_type=jnp.float32)        # (TH, W*Cout) f32

    # Accumulate per-(w, c) batch statistics for this conv's BatchNorm.
    @pl.when(jnp.logical_and(pl.program_id(0) == 0, r == 0))
    def _():
        sum_ref[...] = jnp.zeros_like(sum_ref)
        sq_ref[...] = jnp.zeros_like(sq_ref)

    sum_ref[...] += jnp.sum(y, axis=0, keepdims=True)
    sq_ref[...] += jnp.sum(y * y, axis=0, keepdims=True)

    # Lane-dense store (last dim W*Cout is a multiple of 128 here).
    y_ref[...] = y.reshape(1, th, 1, wc_out)


def _bn_relu_kernel(y_ref, sc_ref, sh_ref, o_ref):
    """Pointwise folded BN (y*s + t) + ReLU on lane-dense (1, TH, 1, W*C)."""
    o_ref[...] = jnp.maximum(
        y_ref[...] * sc_ref[...] + sh_ref[...], 0.0).astype(o_ref.dtype)


# ----------------------------------------------------------------------------
# Wrapper helpers
# ----------------------------------------------------------------------------
def _banded_conv_weight(w_hwio, W, dtype):
    """(3,3,Cin,Cout) HWIO -> (3*W*Cin, W*Cout) banded im2col weight.

    Row index = dy*(W*Cin) + wx*Cin + ci  (matches the dy-shifted, lane-merged
    input rows); col index = w*Cout + co (matches the lane-merged output).
    Taps that would read outside [0, W) are zero -> SAME padding along W.
    """
    KH, KW, Cin, Cout = w_hwio.shape
    wpos = jnp.arange(W)
    dxm = wpos[:, None] - wpos[None, :] + 1                 # (wx, w) -> dx
    valid = (dxm >= 0) & (dxm < KW)
    g = w_hwio[:, jnp.clip(dxm, 0, KW - 1), :, :]           # (KH, wx, w, Cin, Cout)
    g = jnp.where(valid[None, :, :, None, None], g, 0.0)
    g = jnp.transpose(g, (0, 1, 3, 2, 4))                   # (KH, wx, Cin, w, Cout)
    return g.reshape(KH * W * Cin, W * Cout).astype(dtype)


def _fold_bn(sum_wc, sq_wc, gamma, beta, n, W, C):
    """Per-(w,c) partial sums -> folded per-channel BN scale/shift, tiled back
    to the lane-merged (1, W*C) layout used by the kernels."""
    ssum = sum_wc.reshape(W, C).sum(axis=0)
    ssq = sq_wc.reshape(W, C).sum(axis=0)
    mean = ssum / n
    var = ssq / n - mean * mean          # biased batch variance (training BN)
    # TODO(synk): for very large activations use a shifted / two-pass variance
    # to avoid cancellation in E[y^2] - E[y]^2.
    sc = gamma.reshape(-1) * jax.lax.rsqrt(var + EPS)
    sh = beta.reshape(-1) - mean * sc
    return (jnp.tile(sc, W).reshape(1, W * C).astype(jnp.float32),
            jnp.tile(sh, W).reshape(1, W * C).astype(jnp.float32))


def _conv_bn_stats_pass(xm, bw, pre, TH, compiler_params):
    """Tiled conv pass over grid (B, H//TH) with 1-row halos + stats outputs."""
    B, H, _, WC_in = xm.shape
    WC_out = bw.shape[1]
    RT = H // TH

    body_spec = pl.BlockSpec((1, TH, 1, WC_in), lambda b, r: (b, r, 0, 0))
    top_spec = pl.BlockSpec(
        (1, 1, 1, WC_in),
        lambda b, r: (b, jnp.maximum(r * TH - 1, 0), 0, 0))
    bot_spec = pl.BlockSpec(
        (1, 1, 1, WC_in),
        lambda b, r: (b, jnp.minimum(r * TH + TH, H - 1), 0, 0))
    w_spec = pl.BlockSpec(bw.shape, lambda b, r: (0, 0))

    in_specs = [body_spec, top_spec, bot_spec, w_spec]
    args = [xm, xm, xm, bw]
    if pre is not None:
        vspec = pl.BlockSpec((1, WC_in), lambda b, r: (0, 0))
        in_specs += [vspec, vspec]
        args += list(pre)

    kernel = functools.partial(_conv_bn_stats_kernel, pre_act=pre is not None)

    out_shape = (jax.ShapeDtypeStruct((B, H, 1, WC_out), jnp.float32),
                 jax.ShapeDtypeStruct((1, WC_out), jnp.float32),
                 jax.ShapeDtypeStruct((1, WC_out), jnp.float32))
    out_specs = (pl.BlockSpec((1, TH, 1, WC_out), lambda b, r: (b, r, 0, 0)),
                 pl.BlockSpec((1, WC_out), lambda b, r: (0, 0)),
                 pl.BlockSpec((1, WC_out), lambda b, r: (0, 0)))

    return pl.pallas_call(
        kernel,
        out_shape=out_shape,
        grid_spec=pltpu.PrefetchScalarGridSpec(
            num_scalar_prefetch=0,
            grid=(B, RT),
            in_specs=in_specs,
            out_specs=out_specs),
        compiler_params=compiler_params,
    )(*args)


def inconv_forward(x_nchw, params, *, mxu_dtype=jnp.float32, tile_h=8):
    B, Cin, H, W = x_nchw.shape
    Cout = params["w1"].shape[-1]
    TH = tile_h if (H % tile_h == 0) else H
    RT = H // TH
    n = float(B * H * W)

    # Conv passes carry a grid-wide stats accumulator -> axes must be
    # "arbitrary".  The pointwise BN pass has no accumulator -> "parallel"
    # (megacore-shardable on v7x).
    # TODO(synk): per-core partial stats would let the conv passes go
    # "parallel" on v7x as well.
    conv_cp = pltpu.CompilerParams(
        dimension_semantics=("arbitrary", "arbitrary"),
        vmem_limit_bytes=32 * 1024 * 1024)
    pw_cp = pltpu.CompilerParams(
        dimension_semantics=("parallel", "parallel"),
        vmem_limit_bytes=32 * 1024 * 1024)

    # NCHW -> lane-merged NHWC (B, H, 1, W*C); the trailing reshape is free.
    x = jnp.transpose(x_nchw, (0, 2, 3, 1)).astype(mxu_dtype)
    xm = x.reshape(B, H, 1, W * Cin)

    # Pre-reshaped banded conv weights.  Conv biases (params["b1"], ["b2"])
    # are intentionally dropped: bias before training-mode BatchNorm is
    # cancelled exactly by the mean subtraction.
    bw1 = _banded_conv_weight(params["w1"], W, mxu_dtype)   # (3*W*Cin,  W*Cout)
    bw2 = _banded_conv_weight(params["w2"], W, mxu_dtype)   # (3*W*Cout, W*Cout)

    # ---- conv1 + BN1 batch statistics ----
    y1, s1, q1 = _conv_bn_stats_pass(xm, bw1, None, TH, conv_cp)
    sc1, sh1 = _fold_bn(s1, q1, params["g1"], params["be1"], n, W, Cout)

    # ---- (BN1 + ReLU fused in-kernel) -> conv2 + BN2 batch statistics ----
    y2, s2, q2 = _conv_bn_stats_pass(y1, bw2, (sc1, sh1), TH, conv_cp)
    sc2, sh2 = _fold_bn(s2, q2, params["g2"], params["be2"], n, W, Cout)

    # ---- BN2 + ReLU (pointwise, lane-dense) ----
    WC = W * Cout
    out = pl.pallas_call(
        _bn_relu_kernel,
        out_shape=jax.ShapeDtypeStruct((B, H, 1, WC), jnp.float32),
        grid_spec=pltpu.PrefetchScalarGridSpec(
            num_scalar_prefetch=0,
            grid=(B, RT),
            in_specs=[pl.BlockSpec((1, TH, 1, WC), lambda b, r: (b, r, 0, 0)),
                      pl.BlockSpec((1, WC), lambda b, r: (0, 0)),
                      pl.BlockSpec((1, WC), lambda b, r: (0, 0))],
            out_specs=pl.BlockSpec((1, TH, 1, WC), lambda b, r: (b, r, 0, 0))),
        compiler_params=pw_cp,
    )(y2, sc2, sh2)

    # lane-merged (B, H, 1, W*Cout) -> NCHW
    return jnp.transpose(out.reshape(B, H, W, Cout), (0, 3, 1, 2))


# ----------------------------------------------------------------------------
# Parameters and pure-JAX reference
# ----------------------------------------------------------------------------
def init_params(key, in_ch, out_ch):
    """Deterministic synthetic init (conv weights HWIO, BN gamma=1, beta=0)."""
    k1, k2, k3, k4 = jax.random.split(key, 4)
    bound1 = 1.0 / jnp.sqrt(in_ch * 9.0)
    bound2 = 1.0 / jnp.sqrt(out_ch * 9.0)
    return {
        "w1": jax.random.uniform(k1, (3, 3, in_ch, out_ch), jnp.float32,
                                 -bound1, bound1),
        "b1": jax.random.uniform(k2, (1, out_ch), jnp.float32, -bound1, bound1),
        "g1": jnp.ones((1, out_ch), jnp.float32),
        "be1": jnp.zeros((1, out_ch), jnp.float32),
        "w2": jax.random.uniform(k3, (3, 3, out_ch, out_ch), jnp.float32,
                                 -bound2, bound2),
        "b2": jax.random.uniform(k4, (1, out_ch), jnp.float32, -bound2, bound2),
        "g2": jnp.ones((1, out_ch), jnp.float32),
        "be2": jnp.zeros((1, out_ch), jnp.float32),
    }


def _reference(x_nchw, params):
    """Pure-JAX reference (NHWC conv + bias + training-mode BN + ReLU), f32."""
    x = jnp.transpose(x_nchw, (0, 2, 3, 1)).astype(jnp.float32)

    def block(h, w, b, g, be):
        y = jax.lax.conv_general_dilated(
            h, w, window_strides=(1, 1), padding="SAME",
            dimension_numbers=("NHWC", "HWIO", "NHWC"),
            precision=jax.lax.Precision.HIGHEST) + b[0]
        mean = jnp.mean(y, axis=(0, 1, 2))
        var = jnp.mean((y - mean) ** 2, axis=(0, 1, 2))
        yn = (y - mean) * jax.lax.rsqrt(var + EPS) * g[0] + be[0]
        return jnp.maximum(yn, 0.0)

    h = block(x, params["w1"], params["b1"], params["g1"], params["be1"])
    h = block(h, params["w2"], params["b2"], params["g2"], params["be2"])
    return jnp.transpose(h, (0, 3, 1, 2))


if __name__ == "__main__":
    key = jax.random.PRNGKey(0)
    kx, kp = jax.random.split(key)

    B, Cin, Cout, H, W = 2, 4, 8, 16, 16
    x = jax.random.normal(kx, (B, Cin, H, W), jnp.float32)
    params = init_params(kp, Cin, Cout)

    ref = jax.block_until_ready(_reference(x, params))

    # f32 MXU operands: tight check.  bf16 MXU operands (v6e/v7x fast path per
    # the perf review): tolerance sized for bf16 operand rounding propagated
    # through two conv + BN layers.
    for dtype, tol in ((jnp.float32, 2e-3), (jnp.bfloat16, 2e-1)):
        out = jax.block_until_ready(inconv_forward(x, params, mxu_dtype=dtype))
        assert out.shape == (B, Cout, H, W), out.shape
        err = float(jnp.max(jnp.abs(out - ref)))
        assert jnp.allclose(out, ref, atol=tol, rtol=tol), (str(dtype), err)

    print("KERNEL_OK")
</pallas_src>

<mosaic_0001>
module attributes {stable_mosaic.version = 11 : i64} {
  func.func @_conv_bn_stats_kernel(%arg0: i32, %arg1: i32, %arg2: memref<1x8x1x64xf32, #tpu.memory_space<vmem>>, %arg3: memref<1x1x1x64xf32, #tpu.memory_space<vmem>>, %arg4: memref<1x1x1x64xf32, #tpu.memory_space<vmem>>, %arg5: memref<192x128xf32, #tpu.memory_space<vmem>>, %arg6: memref<1x8x1x128xf32, #tpu.memory_space<vmem>>, %arg7: memref<1x128xf32, #tpu.memory_space<vmem>>, %arg8: memref<1x128xf32, #tpu.memory_space<vmem>>) attributes {dimension_semantics = [#tpu.dimension_semantics<arbitrary>, #tpu.dimension_semantics<arbitrary>], iteration_bounds = array<i64: 2, 2>, scalar_prefetch = 0 : i64, scratch_operands = 0 : i64, tpu.core_type = #tpu.core_type<tc>, window_params = [{transform_indices = @transform_0, window_bounds = array<i64: 1, 8, 1, 64>}, {transform_indices = @transform_1, window_bounds = array<i64: 1, 1, 1, 64>}, {transform_indices = @transform_2, window_bounds = array<i64: 1, 1, 1, 64>}, {pipeline_mode = #tpu.pipeline_mode<synchronous>, transform_indices = @transform_3, window_bounds = array<i64: 192, 128>}, {transform_indices = @transform_4, window_bounds = array<i64: 1, 8, 1, 128>}, {pipeline_mode = #tpu.pipeline_mode<synchronous>, transform_indices = @transform_5, window_bounds = array<i64: 1, 128>}, {pipeline_mode = #tpu.pipeline_mode<synchronous>, transform_indices = @transform_6, window_bounds = array<i64: 1, 128>}]} {
    %c0 = arith.constant 0 : index
    %c0_0 = arith.constant 0 : index
    %c0_1 = arith.constant 0 : index
    %c0_2 = arith.constant 0 : index
    %0 = vector.load %arg2[%c0, %c0_0, %c0_1, %c0_2] : memref<1x8x1x64xf32, #tpu.memory_space<vmem>>, vector<1x8x1x64xf32>
    %1 = vector.shape_cast %0 : vector<1x8x1x64xf32> to vector<8x64xf32>
    %c0_3 = arith.constant 0 : index
    %c0_4 = arith.constant 0 : index
    %c0_5 = arith.constant 0 : index
    %c0_6 = arith.constant 0 : index
    %2 = vector.load %arg3[%c0_3, %c0_4, %c0_5, %c0_6] : memref<1x1x1x64xf32, #tpu.memory_space<vmem>>, vector<1x1x1x64xf32>
    %3 = vector.shape_cast %2 : vector<1x1x1x64xf32> to vector<1x64xf32>
    %c0_7 = arith.constant 0 : index
    %c0_8 = arith.constant 0 : index
    %c0_9 = arith.constant 0 : index
    %c0_10 = arith.constant 0 : index
    %4 = vector.load %arg4[%c0_7, %c0_8, %c0_9, %c0_10] : memref<1x1x1x64xf32, #tpu.memory_space<vmem>>, vector<1x1x1x64xf32>
    %5 = vector.shape_cast %4 : vector<1x1x1x64xf32> to vector<1x64xf32>
    %c0_i32 = arith.constant 0 : i32
    %6 = arith.cmpi sgt, %arg1, %c0_i32 : i32
    %7 = arith.extui %6 : i1 to i32
    %8 = arith.sitofp %7 : i32 to f32
    %9 = vector.broadcast %8 : f32 to vector<1x64xf32>
    %10 = arith.mulf %3, %9 : vector<1x64xf32>
    %c1_i32 = arith.constant 1 : i32
    %11 = arith.cmpi slt, %arg1, %c1_i32 : i32
    %12 = arith.extui %11 : i1 to i32
    %13 = arith.sitofp %12 : i32 to f32
    %14 = vector.broadcast %13 : f32 to vector<1x64xf32>
    %15 = arith.mulf %5, %14 : vector<1x64xf32>
    %16 = tpu.concatenate %10, %1, %15 in 0 : vector<1x64xf32>, vector<8x64xf32>, vector<1x64xf32> -> vector<10x64xf32>
    %17 = vector.extract_strided_slice %16 {offsets = [0, 0], sizes = [8, 64], strides = [1, 1]} : vector<10x64xf32> to vector<8x64xf32>
    %18 = vector.extract_strided_slice %16 {offsets = [1, 0], sizes = [8, 64], strides = [1, 1]} : vector<10x64xf32> to vector<8x64xf32>
    %19 = vector.extract_strided_slice %16 {offsets = [2, 0], sizes = [8, 64], strides = [1, 1]} : vector<10x64xf32> to vector<8x64xf32>
    %20 = tpu.concatenate %17, %18, %19 in 1 : vector<8x64xf32>, vector<8x64xf32>, vector<8x64xf32> -> vector<8x192xf32>
    %c0_11 = arith.constant 0 : index
    %c0_12 = arith.constant 0 : index
    %21 = vector.load %arg5[%c0_11, %c0_12] : memref<192x128xf32, #tpu.memory_space<vmem>>, vector<192x128xf32>
    %cst = arith.constant dense<0.000000e+00> : vector<8x128xf32>
    %22 = tpu.matmul %20, %21, %cst {dimension_numbers = #tpu.dot_dimension_numbers<[1], [0], [0], [1], [0, 0, 1, 1], [], []>} : vector<8x192xf32>, vector<192x128xf32>, vector<8x128xf32> -> vector<8x128xf32>
    %c0_i32_13 = arith.constant 0 : i32
    %23 = arith.cmpi eq, %arg0, %c0_i32_13 : i32
    %c0_i32_14 = arith.constant 0 : i32
    %24 = arith.cmpi eq, %arg1, %c0_i32_14 : i32
    %25 = arith.andi %23, %24 : i1
    %26 = arith.extui %25 : i1 to i32
    %c0_i32_15 = arith.constant 0 : i32
    %27 = arith.cmpi ne, %26, %c0_i32_15 : i32
    scf.if %27 {
      %cst_30 = arith.constant 0.000000e+00 : f32
      %41 = vector.broadcast %cst_30 : f32 to vector<1x128xf32>
      %c0_31 = arith.constant 0 : index
      %c0_32 = arith.constant 0 : index
      %42 = vector.load %arg7[%c0_31, %c0_32] : memref<1x128xf32, #tpu.memory_space<vmem>>, vector<1x128xf32>
      tpu.vector_store %arg7[%c0_31, %c0_32], %41 {strides = array<i32>} : memref<1x128xf32, #tpu.memory_space<vmem>>, vector<1x128xf32>,
      %cst_33 = arith.constant 0.000000e+00 : f32
      %43 = vector.broadcast %cst_33 : f32 to vector<1x128xf32>
      %c0_34 = arith.constant 0 : index
      %c0_35 = arith.constant 0 : index
      %44 = vector.load %arg8[%c0_34, %c0_35] : memref<1x128xf32, #tpu.memory_space<vmem>>, vector<1x128xf32>
      tpu.vector_store %arg8[%c0_34, %c0_35], %43 {strides = array<i32>} : memref<1x128xf32, #tpu.memory_space<vmem>>, vector<1x128xf32>,
    } else {
    }
    %c0_16 = arith.constant 0 : index
    %c0_17 = arith.constant 0 : index
    %28 = vector.load %arg7[%c0_16, %c0_17] : memref<1x128xf32, #tpu.memory_space<vmem>>, vector<1x128xf32>
    %cst_18 = arith.constant dense<0.000000e+00> : vector<128xf32>
    %29 = vector.multi_reduction <add>, %22, %cst_18 [0] : vector<8x128xf32> to vector<128xf32>
    %30 = vector.shape_cast %29 : vector<128xf32> to vector<1x128xf32>
    %31 = arith.addf %28, %30 : vector<1x128xf32>
    %c0_19 = arith.constant 0 : index
    %c0_20 = arith.constant 0 : index
    %32 = vector.load %arg7[%c0_19, %c0_20] : memref<1x128xf32, #tpu.memory_space<vmem>>, vector<1x128xf32>
    tpu.vector_store %arg7[%c0_19, %c0_20], %31 {strides = array<i32>} : memref<1x128xf32, #tpu.memory_space<vmem>>, vector<1x128xf32>,
    %c0_21 = arith.constant 0 : index
    %c0_22 = arith.constant 0 : index
    %33 = vector.load %arg8[%c0_21, %c0_22] : memref<1x128xf32, #tpu.memory_space<vmem>>, vector<1x128xf32>
    %34 = arith.mulf %22, %22 : vector<8x128xf32>
    %cst_23 = arith.constant dense<0.000000e+00> : vector<128xf32>
    %35 = vector.multi_reduction <add>, %34, %cst_23 [0] : vector<8x128xf32> to vector<128xf32>
    %36 = vector.shape_cast %35 : vector<128xf32> to vector<1x128xf32>
    %37 = arith.addf %33, %36 : vector<1x128xf32>
    %c0_24 = arith.constant 0 : index
    %c0_25 = arith.constant 0 : index
    %38 = vector.load %arg8[%c0_24, %c0_25] : memref<1x128xf32, #tpu.memory_space<vmem>>, vector<1x128xf32>
    tpu.vector_store %arg8[%c0_24, %c0_25], %37 {strides = array<i32>} : memref<1x128xf32, #tpu.memory_space<vmem>>, vector<1x128xf32>,
    %39 = vector.shape_cast %22 : vector<8x128xf32> to vector<1x8x1x128xf32>
    %c0_26 = arith.constant 0 : index
    %c0_27 = arith.constant 0 : index
    %c0_28 = arith.constant 0 : index
    %c0_29 = arith.constant 0 : index
    %40 = vector.load %arg6[%c0_26, %c0_27, %c0_28, %c0_29] : memref<1x8x1x128xf32, #tpu.memory_space<vmem>>, vector<1x8x1x128xf32>
    tpu.vector_store %arg6[%c0_26, %c0_27, %c0_28, %c0_29], %39 {strides = array<i32>} : memref<1x8x1x128xf32, #tpu.memory_space<vmem>>, vector<1x8x1x128xf32>,
    return
  }
  func.func @transform_0(%arg0: i32, %arg1: i32) -> (i32, i32, i32, i32) {
    %c0_i32 = arith.constant 0 : i32
    %c0_i32_0 = arith.constant 0 : i32
    %c0_i32_1 = arith.constant 0 : i32
    return %arg0, %arg1, %c0_i32, %c0_i32_0 : i32, i32, i32, i32
  }
  func.func @transform_1(%arg0: i32, %arg1: i32) -> (i32, i32, i32, i32) {
    %c8_i32 = arith.constant 8 : i32
    %0 = arith.muli %arg1, %c8_i32 : i32
    %c1_i32 = arith.constant 1 : i32
    %1 = arith.subi %0, %c1_i32 : i32
    %c0_i32 = arith.constant 0 : i32
    %2 = arith.maxsi %1, %c0_i32 : i32
    %c0_i32_0 = arith.constant 0 : i32
    %c0_i32_1 = arith.constant 0 : i32
    %c0_i32_2 = arith.constant 0 : i32
    return %arg0, %2, %c0_i32_0, %c0_i32_1 : i32, i32, i32, i32
  }
  func.func @transform_2(%arg0: i32, %arg1: i32) -> (i32, i32, i32, i32) {
    %c8_i32 = arith.constant 8 : i32
    %0 = arith.muli %arg1, %c8_i32 : i32
    %c8_i32_0 = arith.constant 8 : i32
    %1 = arith.addi %0, %c8_i32_0 : i32
    %c15_i32 = arith.constant 15 : i32
    %2 = arith.minsi %1, %c15_i32 : i32
    %c0_i32 = arith.constant 0 : i32
    %c0_i32_1 = arith.constant 0 : i32
    %c0_i32_2 = arith.constant 0 : i32
    return %arg0, %2, %c0_i32, %c0_i32_1 : i32, i32, i32, i32
  }
  func.func @transform_3(%arg0: i32, %arg1: i32) -> (i32, i32) {
    %c0_i32 = arith.constant 0 : i32
    %c0_i32_0 = arith.constant 0 : i32
    %c0_i32_1 = arith.constant 0 : i32
    return %c0_i32, %c0_i32_0 : i32, i32
  }
  func.func @transform_4(%arg0: i32, %arg1: i32) -> (i32, i32, i32, i32) {
    %c0_i32 = arith.constant 0 : i32
    %c0_i32_0 = arith.constant 0 : i32
    %c0_i32_1 = arith.constant 0 : i32
    return %arg0, %arg1, %c0_i32, %c0_i32_0 : i32, i32, i32, i32
  }
  func.func @transform_5(%arg0: i32, %arg1: i32) -> (i32, i32) {
    %c0_i32 = arith.constant 0 : i32
    %c0_i32_0 = arith.constant 0 : i32
    %c0_i32_1 = arith.constant 0 : i32
    return %c0_i32, %c0_i32_0 : i32, i32
  }
  func.func @transform_6(%arg0: i32, %arg1: i32) -> (i32, i32) {
    %c0_i32 = arith.constant 0 : i32
    %c0_i32_0 = arith.constant 0 : i32
    %c0_i32_1 = arith.constant 0 : i32
    return %c0_i32, %c0_i32_0 : i32, i32
  }
}

</mosaic_0001>

<llo_original>
// kernel: tpu_custom_call.1
$region0: #{tpu_custom_call.1}
  #allocation0 [shape = 'u32[]', space=smem, size = 0x4, offset = 0x4, fixed_abs, tag = 'smem constant byte address 0x4 - core index']
  #allocation1 [shape = 'u32[144,128]{1,0:T(1,128)}', space=vmem, size = 0x12000, scoped, tag = 'internal scratch']
  %s0 = inlined_call_operand.hbm [shape: f32[2,16,1,64], index: 0, kind: input, shape index: {}]
  %s1 = inlined_call_operand.hbm [shape: f32[2,16,1,64], index: 1, kind: input, shape index: {}]
  %s2 = inlined_call_operand.hbm [shape: f32[2,16,1,64], index: 2, kind: input, shape index: {}]
  %s3 = inlined_call_operand.hbm [shape: f32[192,128], index: 3, kind: input, shape index: {}]
  %s4 = inlined_call_operand.hbm [shape: f32[2,16,1,128], index: 4, kind: output, shape index: {0}]
  %s5 = inlined_call_operand.hbm [shape: f32[1,128], index: 5, kind: output, shape index: {1}]
  %s6 = inlined_call_operand.hbm [shape: f32[1,128], index: 6, kind: output, shape index: {2}]
  %7 = xla_tuple %s4, %s5, %s6
  %s8 = sld [smem:[#allocation0]]
  $region85: #{tpu_custom_call.1} parent=0
    _
  %s10 = ssub.s32 1, %s8
  %s11 = scalar_select 0, %s10, %s8
  $region1: #{tpu_custom_call.1} parent=0
    #allocation2 [shape = 'u8[8192]{0}', space=vmem, size = 0x2000, scoped, tag = 'input window, operand 0']
    #allocation3 [shape = 's32[2]{0}', space=sflag, size = 0x8, scoped, tag = 'scoped memory for tpu_custom_call.1']
    #allocation4 [shape = 's32[2]{0}', space=sflag, size = 0x8, scoped, tag = 'scoped memory for tpu_custom_call.1']
    #allocation5 [shape = 'u8[1024]{0}', space=vmem, size = 0x400, scoped, tag = 'input window, operand 1']
    #allocation6 [shape = 's32[2]{0}', space=sflag, size = 0x8, scoped, tag = 'scoped memory for tpu_custom_call.1']
    #allocation7 [shape = 'u8[1024]{0}', space=vmem, size = 0x400, scoped, tag = 'input window, operand 2']
    #allocation8 [shape = 'u8[98304]{0}', space=vmem, size = 0x18000, scoped, tag = 'input window, operand 3, single buffered']
    #allocation9 [shape = 's32[1]{0}', space=sflag, size = 0x4, scoped, tag = 'scoped memory for tpu_custom_call.1']
    #allocation10 [shape = 'u8[8192]{0}', space=vmem, size = 0x2000, scoped, tag = 'output window, operand 0']
    #allocation11 [shape = 'u8[512]{0}', space=vmem, size = 0x400, scoped, tag = 'output window, operand 1, single buffered']
    #allocation12 [shape = 's32[1]{0}', space=sflag, size = 0x4, scoped, tag = 'scoped memory for tpu_custom_call.1']
    #allocation13 [shape = 'u8[512]{0}', space=vmem, size = 0x400, scoped, tag = 'output window, operand 2, single buffered']
    %12 = vsyncpa [#allocation3], 0
    %s13 = scalar_lea.sflag [#allocation3], 1
    %14 = vsyncpa %s13, 0
    %15 = vsyncpa [#allocation6], 0
    %s16 = scalar_lea.sflag [#allocation6], 1
    %17 = vsyncpa %s16, 0
    %18 = vsyncpa [#allocation9], 0
    %19 = vsyncpa [#allocation4], 0
    %s20 = scalar_lea.sflag [#allocation4], 1
    %21 = vsyncpa %s20, 0
    %22 = vsyncpa [#allocation12], 0
    loop: start=0, step=1, limit=6
    $region2: #{tpu_custom_call.1} parent=1 // loop_pre_header
      _
    $region3: #{tpu_custom_call.1} parent=1 // loop_header
      %s24 = sphi 0, %s28
      %p25 = scmp.ge.s32.totalorder %s24, 6
      %s31 = sphi 0, %s43
      %s32 = sphi 0, %s39
      %s33 = sphi 0, %s31
      %s34 = sphi 0, %s32
      %s35 = sphi 0, %s33
      %s36 = sphi 0, %s34
      %s48 = sphi 0, %s50
      %s51 = sphi 0, %s48
      %s52 = sphi 0, %s51
      %s68 = sphi 0, %s52
      %s84 = sphi 0, %s86
      %s87 = sphi 0, %s84
      %s88 = sphi 0, %s87
      %s104 = sphi 0, %s88
      %s120 = sphi 0, %s122
      %s123 = sphi 0, %s120
      %s124 = sphi 0, %s123
      %s140 = sphi 0, %s124
      %s144 = sphi 0, %s144
      %s146 = sphi 0, %s144
      %s147 = sphi 0, %s146
      %s161 = sphi 0, %s147
      %s169 = sphi 0, %s171
      %s172 = sphi 0, %s169
      %s173 = sphi 0, %s172
      %s189 = sphi 0, %s173
      %s193 = sphi 0, %s193
      %s195 = sphi 0, %s193
      %s196 = sphi 0, %s195
      %s210 = sphi 0, %s196
      %s214 = sphi 0, %s214
      %s216 = sphi 0, %s214
      %s217 = sphi 0, %s216
      %s231 = sphi 0, %s217
    $region4: #{tpu_custom_call.1} parent=1 // loop_header_branch
      %27 = sbr.rel (%p25) target = $region8
    $region5: #{tpu_custom_call.1} parent=1 // loop_body
      %s29 = ssub.s32 %s24, 1
      %s30 = ssub.s32 %s24, 2
      %s37 = sadd.s32 1, %s32
      %p38 = scmp.ge.s32.totalorder %s37, 2
      %s39 = scalar_select %p38, 0, %s37
      %s40 = sadd.s32 1, %s31
      %s41 = scalar_select %p38, %s40, %s31
      %p42 = scmp.ge.s32.totalorder %s41, 2
      %s43 = scalar_select %p42, 0, %s41
      %s44 = ssub.s32 %s31, %s43
      %s45 = ssub.s32 %s32, %s39
      %s46 = sor.u32 %s44, %s45
      %p47 = scmp.eq.s32.totalorder %s46, 0
      %s49 = sadd.s32 %s48, 1
      %s50 = scalar_select %p47, %s48, %s49
      %p53 = pneg %p47
      %p54 = scmp.eq.s32.totalorder %s24, 3
      %p55 = por %p53, %p54
      %p56 = scmp.ne.s32.totalorder %s48, %s51
      %p57 = scmp.eq.s32.totalorder %s24, 0
      %p58 = por %p56, %p57
      %p59 = scmp.ne.s32.totalorder %s48, %s51
      %p60 = scmp.eq.s32.totalorder %s29, 3
      %p61 = por %p59, %p60
      %p62 = scmp.ne.s32.totalorder %s51, %s52
      %p63 = scmp.eq.s32.totalorder %s29, 0
      %p64 = por %p62, %p63
      %p65 = scmp.ne.s32.totalorder %s51, %s52
      %p66 = scmp.eq.s32.totalorder %s30, 3
      %p67 = por %p65, %p66
      %p69 = scmp.ne.s32.totalorder %s52, %s68
      %p70 = scmp.eq.s32.totalorder %s30, 0
      %p71 = por %p69, %p70
      %s72 = smul.u32 %s32, 8
      %s73 = ssub.s32 %s72, 1
      %p74 = scmp.gt.s32.totalorder %s73, 0
      %s75 = scalar_select %p74, %s73, 0
      %s76 = smul.u32 %s39, 8
      %s77 = ssub.s32 %s76, 1
      %p78 = scmp.gt.s32.totalorder %s77, 0
      %s79 = scalar_select %p78, %s77, 0
      %s80 = ssub.s32 %s31, %s43
      %s81 = ssub.s32 %s75, %s79
      %s82 = sor.u32 %s80, %s81
      %p83 = scmp.eq.s32.totalorder %s82, 0
      %s85 = sadd.s32 %s84, 1
      %s86 = scalar_select %p83, %s84, %s85
      %p89 = pneg %p83
      %p90 = scmp.eq.s32.totalorder %s24, 3
      %p91 = por %p89, %p90
      %p92 = scmp.ne.s32.totalorder %s84, %s87
      %p93 = scmp.eq.s32.totalorder %s24, 0
      %p94 = por %p92, %p93
      %p95 = scmp.ne.s32.totalorder %s84, %s87
      %p96 = scmp.eq.s32.totalorder %s29, 3
      %p97 = por %p95, %p96
      %p98 = scmp.ne.s32.totalorder %s87, %s88
      %p99 = scmp.eq.s32.totalorder %s29, 0
      %p100 = por %p98, %p99
      %p101 = scmp.ne.s32.totalorder %s87, %s88
      %p102 = scmp.eq.s32.totalorder %s30, 3
      %p103 = por %p101, %p102
      %p105 = scmp.ne.s32.totalorder %s88, %s104
      %p106 = scmp.eq.s32.totalorder %s30, 0
      %p107 = por %p105, %p106
      %s108 = smul.u32 %s32, 8
      %s109 = sadd.s32 %s108, 8
      %p110 = scmp.lt.s32.totalorder %s109, 15
      %s111 = scalar_select %p110, %s109, 15
      %s112 = smul.u32 %s39, 8
      %s113 = sadd.s32 %s112, 8
      %p114 = scmp.lt.s32.totalorder %s113, 15
      %s115 = scalar_select %p114, %s113, 15
      %s116 = ssub.s32 %s31, %s43
      %s117 = ssub.s32 %s111, %s115
      %s118 = sor.u32 %s116, %s117
      %p119 = scmp.eq.s32.totalorder %s118, 0
      %s121 = sadd.s32 %s120, 1
      %s122 = scalar_select %p119, %s120, %s121
      %p125 = pneg %p119
      %p126 = scmp.eq.s32.totalorder %s24, 3
      %p127 = por %p125, %p126
      %p128 = scmp.ne.s32.totalorder %s120, %s123
      %p129 = scmp.eq.s32.totalorder %s24, 0
      %p130 = por %p128, %p129
      %p131 = scmp.ne.s32.totalorder %s120, %s123
      %p132 = scmp.eq.s32.totalorder %s29, 3
      %p133 = por %p131, %p132
      %p134 = scmp.ne.s32.totalorder %s123, %s124
      %p135 = scmp.eq.s32.totalorder %s29, 0
      %p136 = por %p134, %p135
      %p137 = scmp.ne.s32.totalorder %s123, %s124
      %p138 = scmp.eq.s32.totalorder %s30, 3
      %p139 = por %p137, %p138
      %p141 = scmp.ne.s32.totalorder %s124, %s140
      %p142 = scmp.eq.s32.totalorder %s30, 0
      %p143 = por %p141, %p142
      %s145 = sadd.s32 %s144, 1
      %p148 = scmp.eq.s32.totalorder %s24, 3
      %p149 = scmp.ne.s32.totalorder %s144, %s146
      %p150 = scmp.eq.s32.totalorder %s24, 0
      %p151 = por %p149, %p150
      %p152 = scmp.ne.s32.totalorder %s144, %s146
      %p153 = scmp.eq.s32.totalorder %s29, 3
      %p154 = por %p152, %p153
      %p155 = scmp.ne.s32.totalorder %s146, %s147
      %p156 = scmp.eq.s32.totalorder %s29, 0
      %p157 = por %p155, %p156
      %p158 = scmp.ne.s32.totalorder %s146, %s147
      %p159 = scmp.eq.s32.totalorder %s30, 3
      %p160 = por %p158, %p159
      %p162 = scmp.ne.s32.totalorder %s147, %s161
      %p163 = scmp.eq.s32.totalorder %s30, 0
      %p164 = por %p162, %p163
      %s165 = ssub.s32 %s31, %s43
      %s166 = ssub.s32 %s32, %s39
      %s167 = sor.u32 %s165, %s166
      %p168 = scmp.eq.s32.totalorder %s167, 0
      %s170 = sadd.s32 %s169, 1
      %s171 = scalar_select %p168, %s169, %s170
      %p174 = pneg %p168
      %p175 = scmp.eq.s32.totalorder %s24, 3
      %p176 = por %p174, %p175
      %p177 = scmp.ne.s32.totalorder %s169, %s172
      %p178 = scmp.eq.s32.totalorder %s24, 0
      %p179 = por %p177, %p178
      %p180 = scmp.ne.s32.totalorder %s169, %s172
      %p181 = scmp.eq.s32.totalorder %s29, 3
      %p182 = por %p180, %p181
      %p183 = scmp.ne.s32.totalorder %s172, %s173
      %p184 = scmp.eq.s32.totalorder %s29, 0
      %p185 = por %p183, %p184
      %p186 = scmp.ne.s32.totalorder %s172, %s173
      %p187 = scmp.eq.s32.totalorder %s30, 3
      %p188 = por %p186, %p187
      %p190 = scmp.ne.s32.totalorder %s173, %s189
      %p191 = scmp.eq.s32.totalorder %s30, 0
      %p192 = por %p190, %p191
      %s194 = sadd.s32 %s193, 1
      %p197 = scmp.eq.s32.totalorder %s24, 3
      %p198 = scmp.ne.s32.totalorder %s193, %s195
      %p199 = scmp.eq.s32.totalorder %s24, 0
      %p200 = por %p198, %p199
      %p201 = scmp.ne.s32.totalorder %s193, %s195
      %p202 = scmp.eq.s32.totalorder %s29, 3
      %p203 = por %p201, %p202
      %p204 = scmp.ne.s32.totalorder %s195, %s196
      %p205 = scmp.eq.s32.totalorder %s29, 0
      %p206 = por %p204, %p205
      %p207 = scmp.ne.s32.totalorder %s195, %s196
      %p208 = scmp.eq.s32.totalorder %s30, 3
      %p209 = por %p207, %p208
      %p211 = scmp.ne.s32.totalorder %s196, %s210
      %p212 = scmp.eq.s32.totalorder %s30, 0
      %p213 = por %p211, %p212
      %s215 = sadd.s32 %s214, 1
      %p218 = scmp.eq.s32.totalorder %s24, 3
      %p219 = scmp.ne.s32.totalorder %s214, %s216
      %p220 = scmp.eq.s32.totalorder %s24, 0
      %p221 = por %p219, %p220
      %p222 = scmp.ne.s32.totalorder %s214, %s216
      %p223 = scmp.eq.s32.totalorder %s29, 3
      %p224 = por %p222, %p223
      %p225 = scmp.ne.s32.totalorder %s216, %s217
      %p226 = scmp.eq.s32.totalorder %s29, 0
      %p227 = por %p225, %p226
      %p228 = scmp.ne.s32.totalorder %s216, %s217
      %p229 = scmp.eq.s32.totalorder %s30, 3
      %p230 = por %p228, %p229
      %p232 = scmp.ne.s32.totalorder %s217, %s231
      %p233 = scmp.eq.s32.totalorder %s30, 0
      %p234 = por %p232, %p233
      %p235 = scmp.le.s32.totalorder 1, %s24
      %p236 = scmp.lt.s32.totalorder %s24, 5
      %p237 = pnand %p235, %p236
      %p238 = pneg %p237
      // Predicated region
      $region9: #{tpu_custom_call.1} parent=5 // pred_check
        _
      $region10: #{tpu_custom_call.1} parent=5 // pred_check_branch
        %240 = sbr.rel (%p237) target = $region12
      $region11: #{tpu_custom_call.1} parent=5 // pred_region
        %s241 = ssub.s32 %s24, 1
        // Predicated region
        $region13: #{tpu_custom_call.1} parent=11 // pred_check
          %p242 = pneg %p157
        $region14: #{tpu_custom_call.1} parent=11 // pred_check_branch
          %244 = sbr.rel (%p242) target = $region16
        $region15: #{tpu_custom_call.1} parent=11 // pred_region
          %s246 = ssub.s32 3072, 3072
          %247 = vsyncadd [#allocation9], %s246
          %s248 = sshll.u32 [#allocation8], 4
          %s249 = int_to_ptr.vmem [resolvable:$true] %s248
          %254 = dma.hbm_to_vmem [thread:$0]  %s3, 3072, %s249, [#allocation9], 128, 128, 8
        $region16: #{tpu_custom_call.1} parent=11 // pred_fallthru
          _
      $region12: #{tpu_custom_call.1} parent=5 // pred_fallthru
        _
      %p255 = scmp.lt.s32.totalorder %s24, 4
      // Predicated region
      $region17: #{tpu_custom_call.1} parent=5 // pred_check
        %p256 = pneg %p255
      $region18: #{tpu_custom_call.1} parent=5 // pred_check_branch
        %258 = sbr.rel (%p256) target = $region20
      $region19: #{tpu_custom_call.1} parent=5 // pred_region
        // Predicated region
        $region21: #{tpu_custom_call.1} parent=19 // pred_check
          %p259 = pneg %p58
        $region22: #{tpu_custom_call.1} parent=19 // pred_check_branch
          %261 = sbr.rel (%p259) target = $region24
        $region23: #{tpu_custom_call.1} parent=19 // pred_region
          %s262 = sand.u32 %s48, 1
          %s263 = scalar_lea.sflag [#allocation3], %s262
          %s264 = sand.u32 %s48, 1
          %s265 = smul.addr %s264, 8
          %s266 = scalar_lea.vmem [#allocation2], %s265
          %s267 = smul.u32 8, %s32
          %s269 = ssub.s32 128, 128
          %270 = vsyncadd %s263, %s269
          %s271 = smul.addr %s31, 16
          %s272 = sadd.s32 %s267, %s271
          %s273 = smul.addr %s272, 16
          %s274 = scalar_lea.hbm %s0, %s273
          %s275 = sshll.u32 %s266, 4
          %s276 = int_to_ptr.vmem [resolvable:$true] %s275
          %281 = dma.hbm_to_vmem [thread:$0]  %s274, 128, %s276, %s263, 16, 16, 1
        $region24: #{tpu_custom_call.1} parent=19 // pred_fallthru
          _
        // Predicated region
        $region25: #{tpu_custom_call.1} parent=19 // pred_check
          %p282 = pneg %p94
        $region26: #{tpu_custom_call.1} parent=19 // pred_check_branch
          %284 = sbr.rel (%p282) target = $region28
        $region27: #{tpu_custom_call.1} parent=19 // pred_region
          %s285 = sand.u32 %s24, 1
          %s286 = scalar_lea.sflag [#allocation6], %s285
          %s287 = sand.u32 %s84, 1
          %s288 = scalar_lea.vmem [#allocation5], %s287
          %s289 = smul.u32 %s32, 8
          %s290 = ssub.s32 %s289, 1
          %p291 = scmp.gt.s32.totalorder %s290, 0
          %s292 = scalar_select %p291, %s290, 0
          %s294 = ssub.s32 16, 16
          %295 = vsyncadd %s286, %s294
          %s296 = smul.addr %s31, 16
          %s297 = sadd.s32 %s292, %s296
          %s298 = smul.addr %s297, 16
          %s299 = scalar_lea.hbm %s1, %s298
          %s301 = sshll.u32 %s288, 4
          %s302 = int_to_ptr.vmem [resolvable:$true] %s301
          %304 = dma.hbm_to_vmem [thread:$0]  %s299, 16, %s302, %s286
        $region28: #{tpu_custom_call.1} parent=19 // pred_fallthru
          _
        // Predicated region
        $region29: #{tpu_custom_call.1} parent=19 // pred_check
          %p305 = pneg %p130
        $region30: #{tpu_custom_call.1} parent=19 // pred_check_branch
          %307 = sbr.rel (%p305) target = $region32
        $region31: #{tpu_custom_call.1} parent=19 // pred_region
          %s308 = sand.u32 %s24, 1
          %s309 = scalar_lea.sflag [#allocation6], %s308
          %s310 = sand.u32 %s120, 1
          %s311 = scalar_lea.vmem [#allocation7], %s310
          %s312 = smul.u32 %s32, 8
          %s313 = sadd.s32 %s312, 8
          %p314 = scmp.lt.s32.totalorder %s313, 15
          %s315 = scalar_select %p314, %s313, 15
          %s317 = ssub.s32 16, 16
          %318 = vsyncadd %s309, %s317
          %s319 = smul.addr %s31, 16
          %s320 = sadd.s32 %s315, %s319
          %s321 = smul.addr %s320, 16
          %s322 = scalar_lea.hbm %s2, %s321
          %s324 = sshll.u32 %s311, 4
          %s325 = int_to_ptr.vmem [resolvable:$true] %s324
          %327 = dma.hbm_to_vmem [thread:$0]  %s322, 16, %s325, %s309
        $region32: #{tpu_custom_call.1} parent=19 // pred_fallthru
          _
      $region20: #{tpu_custom_call.1} parent=5 // pred_fallthru
        _
      %p328 = scmp.le.s32.totalorder 1, %s24
      %p329 = scmp.lt.s32.totalorder %s24, 5
      %p330 = pnand %p328, %p329
      %p331 = pneg %p330
      // Predicated region
      $region33: #{tpu_custom_call.1} parent=5 // pred_check
        _
      $region34: #{tpu_custom_call.1} parent=5 // pred_check_branch
        %333 = sbr.rel (%p330) target = $region36
      $region35: #{tpu_custom_call.1} parent=5 // pred_region
        %s334 = ssub.s32 %s24, 1
        %s335 = sand.u32 %s51, 1
        %s336 = scalar_lea.sflag [#allocation3], %s335
        %s337 = sand.u32 %s51, 1
        %s338 = smul.addr %s337, 8
        %s339 = scalar_lea.vmem [#allocation2], %s338
        // Predicated region
        $region37: #{tpu_custom_call.1} parent=35 // pred_check
          %p340 = pneg %p64
        $region38: #{tpu_custom_call.1} parent=35 // pred_check_branch
          %342 = sbr.rel (%p340) target = $region40
        $region39: #{tpu_custom_call.1} parent=35 // pred_region
          %343 = dma.done %s336, 128
        $region40: #{tpu_custom_call.1} parent=35 // pred_fallthru
          _
        %s344 = sand.u32 %s29, 1
        %s345 = scalar_lea.sflag [#allocation6], %s344
        %s346 = sand.u32 %s87, 1
        %s347 = scalar_lea.vmem [#allocation5], %s346
        // Predicated region
        $region41: #{tpu_custom_call.1} parent=35 // pred_check
          %p348 = pneg %p100
        $region42: #{tpu_custom_call.1} parent=35 // pred_check_branch
          %350 = sbr.rel (%p348) target = $region44
        $region43: #{tpu_custom_call.1} parent=35 // pred_region
          %351 = dma.done %s345, 16
        $region44: #{tpu_custom_call.1} parent=35 // pred_fallthru
          _
        %s352 = sand.u32 %s29, 1
        %s353 = scalar_lea.sflag [#allocation6], %s352
        %s354 = sand.u32 %s123, 1
        %s355 = scalar_lea.vmem [#allocation7], %s354
        // Predicated region
        $region45: #{tpu_custom_call.1} parent=35 // pred_check
          %p356 = pneg %p136
        $region46: #{tpu_custom_call.1} parent=35 // pred_check_branch
          %358 = sbr.rel (%p356) target = $region48
        $region47: #{tpu_custom_call.1} parent=35 // pred_region
          %359 = dma.done %s353, 16
        $region48: #{tpu_custom_call.1} parent=35 // pred_fallthru
          _
        // Predicated region
        $region49: #{tpu_custom_call.1} parent=35 // pred_check
          %p360 = pneg %p157
        $region50: #{tpu_custom_call.1} parent=35 // pred_check_branch
          %362 = sbr.rel (%p360) target = $region52
        $region51: #{tpu_custom_call.1} parent=35 // pred_region
          %363 = dma.done [#allocation9], 3072
        $region52: #{tpu_custom_call.1} parent=35 // pred_fallthru
          _
        %s364 = sand.u32 %s51, 1
        %s365 = scalar_lea.sflag [#allocation3], %s364
        %s366 = sand.u32 %s51, 1
        %s367 = smul.addr %s366, 8
        %s368 = scalar_lea.vmem [#allocation2], %s367
        %p369 = pneg %p64
        %p370 = pneg %p61
        %s371 = sand.u32 %s29, 1
        %s372 = scalar_lea.sflag [#allocation6], %s371
        %s373 = sand.u32 %s87, 1
        %s374 = scalar_lea.vmem [#allocation5], %s373
        %p375 = pneg %p100
        %p376 = pneg %p97
        %s377 = sand.u32 %s29, 1
        %s378 = scalar_lea.sflag [#allocation6], %s377
        %s379 = sand.u32 %s123, 1
        %s380 = scalar_lea.vmem [#allocation7], %s379
        %p381 = pneg %p136
        %p382 = pneg %p133
        %p383 = pneg %p157
        %p384 = pneg %p154
        %p385 = pneg %p185
        %p386 = pneg %p182
        %s387 = sand.u32 %s172, 1
        %s388 = scalar_lea.sflag [#allocation4], %s387
        %s389 = sand.u32 %s172, 1
        %s390 = smul.addr %s389, 8
        %s391 = scalar_lea.vmem [#allocation10], %s390
        %p392 = pneg %p206
        %p393 = pneg %p203
        %p394 = pneg %p227
        %p395 = pneg %p224
        %s396 = smul.u32 8, %s34
        %s397 = smul.u32 %s34, 8
        %s398 = ssub.s32 %s397, 1
        %p399 = scmp.gt.s32.totalorder %s398, 0
        %s400 = scalar_select %p399, %s398, 0
        %s401 = smul.u32 %s34, 8
        %s402 = sadd.s32 %s401, 8
        %p403 = scmp.lt.s32.totalorder %s402, 15
        %s404 = scalar_select %p403, %s402, 15
        %s405 = smul.u32 8, %s34
        %v406 = vld [vmem:[%s339] sm:$0x1]
        %v407 = vld [vmem:[%s339 + $0x1] sm:$0x1]
        %v408 = vld [vmem:[%s339 + $0x2] sm:$0x1]
        %v409 = vld [vmem:[%s339 + $0x3] sm:$0x1]
        %v410 = vld [vmem:[%s339 + $0x4] sm:$0x1]
        %v411 = vld [vmem:[%s339 + $0x5] sm:$0x1]
        %v412 = vld [vmem:[%s339 + $0x6] sm:$0x1]
        %v413 = vld [vmem:[%s339 + $0x7] sm:$0x1]
        %v414 = vld [vmem:[%s347] sm:$0x1]
        %v415 = vld [vmem:[%s355] sm:$0x1]
        %p416 = scmp.gt.s32.totalorder %s34, 0
        %s417 = scalar_select %p416, 1, 0
        %s418 = scvt.s32.f32 %s417
        %v419 = vstv %s418
        %v420 = vmul.f32 %v414, %v419
        %p421 = scmp.lt.s32.totalorder %s34, 1
        %s422 = scalar_select %p421, 1, 0
        %s423 = scvt.s32.f32 %s422
        %v424 = vstv %s423
        %v425 = vmul.f32 %v415, %v424
        %v434 = vcombine.low %v406, %v406
        %v435 = vcombine.low %v407, %v408
        %v436 = vcombine.low %v409, %v410
        %v437 = vcombine.low %v411, %v412
        %v439 = vunpack.c.l.s4 1966171168
        %v440 = vunpack.c.0.s8 %v439
        %v441 = vlaneseq
        %v442 = vshrl.u32 %v441, 7
        %v443 = vsub.s32 %v440, %v442
        %v444 = vrot.slane %v434, %v443
        %v446 = vunpack.c.l.s4 1966171168
        %v447 = vunpack.c.0.s8 %v446
        %v448 = vlaneseq
        %v449 = vshrl.u32 %v448, 7
        %v450 = vsub.s32 %v447, %v449
        %v451 = vrot.slane %v435, %v450
        %v453 = vunpack.c.l.s4 1966171168
        %v454 = vunpack.c.0.s8 %v453
        %v455 = vlaneseq
        %v456 = vshrl.u32 %v455, 7
        %v457 = vsub.s32 %v454, %v456
        %v458 = vrot.slane %v436, %v457
        %v460 = vunpack.c.l.s4 1966171168
        %v461 = vunpack.c.0.s8 %v460
        %v462 = vlaneseq
        %v463 = vshrl.u32 %v462, 7
        %v464 = vsub.s32 %v461, %v463
        %v465 = vrot.slane %v437, %v464
        %v466 = vcombine.low %v444, %v451
        %v467 = vcombine.low %v458, %v465
        %v469 = vunpack.c.l.s4 1966171168
        %v470 = vunpack.c.0.s8 %v469
        %v471 = vlaneseq
        %v472 = vshrl.u32 %v471, 7
        %v473 = vsub.s32 %v470, %v472
        %v474 = vrot.slane %v466, %v473
        %v476 = vunpack.c.l.s4 1966171168
        %v477 = vunpack.c.0.s8 %v476
        %v478 = vlaneseq
        %v479 = vshrl.u32 %v478, 7
        %v480 = vsub.s32 %v477, %v479
        %v481 = vrot.slane %v467, %v480
        %v482 = vcombine.low %v474, %v481
        %v484 = vunpack.c.l.s4 1966171168
        %v485 = vunpack.c.0.s8 %v484
        %v486 = vlaneseq
        %v487 = vshrl.u32 %v486, 7
        %v488 = vsub.s32 %v485, %v487
        %v489 = vrot.slane %v413, %v488
        %v491 = vunpack.c.l.s4 1966171168
        %v492 = vunpack.c.0.s8 %v491
        %v493 = vlaneseq
        %v494 = vshrl.u32 %v493, 7
        %v495 = vsub.s32 %v492, %v494
        %v496 = vrot.slane %v489, %v495
        %v500 = vlaneseq
        %v501 = vshrl.u32 %v500, 7
        %v502 = vsub.s32 0, %v501
        %v503 = vrot.slane %v425, %v502
        %vm505 = vcmask 1040384
        %v506 = vsel %vm505, %v420, %v482
        %v507 = vsel %vm505, %v496, %v503
        %vm510 = vcmask 1046528
        %v511 = vrot.slane %v506, 1
        %v512 = vrot.slane %v507, 1
        %v513 = vsel %vm510, %v511, %v512
        %514 = vrot.lane.b32.xlu0 %v513, 64
        %v515 = vpop.permute.xlu0 %514
        %vm517 = vcmask 1045504
        %v518 = vrot.slane %v506, 2
        %v519 = vrot.slane %v507, 2
        %v520 = vsel %vm517, %v518, %v519
        %vm521 = vcmask 523264
        %v522 = vsel %vm521, %v506, %v515
        %v523 = vld [vmem:[#allocation8] sm:$0xff]
        %v524 = vld [vmem:[#allocation8 + $0x8] sm:$0xff]
        %v525 = vld [vmem:[#allocation8 + $0x10] sm:$0xff]
        %v526 = vld [vmem:[#allocation8 + $0x18] sm:$0xff]
        %v527 = vld [vmem:[#allocation8 + $0x20] sm:$0xff]
        %v528 = vld [vmem:[#allocation8 + $0x28] sm:$0xff]
        %v529 = vld [vmem:[#allocation8 + $0x30] sm:$0xff]
        %v530 = vld [vmem:[#allocation8 + $0x38] sm:$0xff]
        %v531 = vld [vmem:[#allocation8 + $0x40] sm:$0xff]
        %v532 = vld [vmem:[#allocation8 + $0x48] sm:$0xff]
        %v533 = vld [vmem:[#allocation8 + $0x50] sm:$0xff]
        %v534 = vld [vmem:[#allocation8 + $0x58] sm:$0xff]
        %v535 = vld [vmem:[#allocation8 + $0x60] sm:$0xff]
        %v536 = vld [vmem:[#allocation8 + $0x68] sm:$0xff]
        %v537 = vld [vmem:[#allocation8 + $0x70] sm:$0xff]
        %v538 = vld [vmem:[#allocation8 + $0x78] sm:$0xff]
        %v539 = vld [vmem:[#allocation8 + $0x80] sm:$0xff]
        %v540 = vld [vmem:[#allocation8 + $0x88] sm:$0xff]
        %v541 = vld [vmem:[#allocation8 + $0x90] sm:$0xff]
        %v542 = vld [vmem:[#allocation8 + $0x98] sm:$0xff]
        %v543 = vld [vmem:[#allocation8 + $0xa0] sm:$0xff]
        %v544 = vld [vmem:[#allocation8 + $0xa8] sm:$0xff]
        %v545 = vld [vmem:[#allocation8 + $0xb0] sm:$0xff]
        %v546 = vld [vmem:[#allocation8 + $0xb8] sm:$0xff]
        %v547 = vsel %vm521, %v520, 0
        %549 = vmatprep.subr.mxu0 0.0
        %550 = vmatpush1.msra.mxu0 %v523
        %551 = vmatprep.subr.mxu0 0.0
        %552 = vmatpush1.msra.mxu0 %v524
        %553 = vmatprep.subr.mxu0 0.0
        %554 = vmatpush1.msra.mxu0 %v525
        %555 = vmatprep.subr.mxu0 0.0
        %556 = vmatpush1.msra.mxu0 %v526
        %557 = vmatprep.subr.mxu0 0.0
        %558 = vmatpush1.msra.mxu0 %v527
        %559 = vmatprep.subr.mxu0 0.0
        %560 = vmatpush1.msra.mxu0 %v528
        %561 = vmatprep.subr.mxu0 0.0
        %562 = vmatpush1.msra.mxu0 %v529
        %563 = vmatprep.subr.mxu0 0.0
        %564 = vmatpush1.msra.mxu0 %v530
        %565 = vmatprep.subr.mxu0 0.0
        %566 = vmatpush1.msra.mxu0 %v531
        %567 = vmatprep.subr.mxu0 0.0
        %568 = vmatpush1.msra.mxu0 %v532
        %569 = vmatprep.subr.mxu0 0.0
        %570 = vmatpush1.msra.mxu0 %v533
        %571 = vmatprep.subr.mxu0 0.0
        %572 = vmatpush1.msra.mxu0 %v534
        %573 = vmatprep.subr.mxu0 0.0
        %574 = vmatpush1.msra.mxu0 %v535
        %575 = vmatprep.subr.mxu0 0.0
        %576 = vmatpush1.msra.mxu0 %v536
        %577 = vmatprep.subr.mxu0 0.0
        %578 = vmatpush1.msra.mxu0 %v537
        %579 = vmatprep.subr.mxu0 0.0
        %580 = vmatpush1.msra.mxu0 %v538
        %581 = vmatprep.subr.mxu0 0.0
        %582 = vmatpush1.msra.mxu0 %v539
        %583 = vmatprep.subr.mxu0 0.0
        %584 = vmatpush1.msra.mxu0 %v540
        %585 = vmatprep.subr.mxu0 0.0
        %586 = vmatpush1.msra.mxu0 %v541
        %587 = vmatprep.subr.mxu0 0.0
        %588 = vmatpush1.msra.mxu0 %v542
        %589 = vmatprep.subr.mxu0 0.0
        %590 = vmatpush1.msra.mxu0 %v543
        %591 = vmatprep.subr.mxu0 0.0
        %592 = vmatpush1.msra.mxu0 %v544
        %593 = vmatprep.subr.mxu0 0.0
        %594 = vmatpush1.msra.mxu0 %v545
        %595 = vmatprep.subr.mxu0 0.0
        %596 = vmatpush1.msra.mxu0 %v546
        %597 = vmatprep.subr.mxu0 0.0
        %598 = vmatpush1.msra.mxu0 0.0
        %599 = vmatprep.subr.mxu0 0.0
        %600 = vmatpush1.msra.mxu0 0.0
        %601 = vmatprep.subr.mxu0 0.0
        %602 = vmatpush1.msra.mxu0 0.0
        %603 = vmatprep.subr.mxu0 0.0
        %604 = vmatpush1.msra.mxu0 0.0
        %605 = vmatprep.subr.mxu0 0.0
        %606 = vmatpush1.msra.mxu0 0.0
        %607 = vmatprep.subr.mxu0 0.0
        %608 = vmatpush1.msra.mxu0 0.0
        %609 = vmatprep.subr.mxu0 0.0
        %610 = vmatpush1.msra.mxu0 0.0
        %611 = vmatprep.subr.mxu0 0.0
        %612 = vmatpush1.msra.mxu0 0.0
        %613 = vmatprep.mubr.f32.mxu0 %v547
        %614 = vmatmul.mubr.f32.gmra.mrb[0].mxu0 %v522
        %v615 = vpop.f32.mrb[0].mxu0
        %v616 = vadd.f32 0.0, %v615
        %v617 = vpop.f32.mrb[0].mxu0
        %618 = vdwg.mxu0
        %p619 = scmp.eq.s32.totalorder %s33, 0
        %p620 = scmp.eq.s32.totalorder %s34, 0
        %p621 = pnand %p619, %p620
        %p622 = pneg %p621
        // Predicated region
        $region53: #{tpu_custom_call.1} parent=35 // pred_check
          _
        $region54: #{tpu_custom_call.1} parent=35 // pred_check_branch
          %624 = sbr.rel (%p621) target = $region56
        $region55: #{tpu_custom_call.1} parent=35 // pred_region
          %625 = vst [vmem:[#allocation11] sm:$0x1] 0.0
          %626 = vst [vmem:[#allocation13] sm:$0x1] 0.0
        $region56: #{tpu_custom_call.1} parent=35 // pred_fallthru
          _
        %v627 = vld [vmem:[#allocation11] sm:$0x1]
        %v628 = vrot.slane %v616, 4
        %v629 = vadd.f32 %v616, %v628
        %v630 = vrot.slane %v629, 2
        %v631 = vadd.f32 %v629, %v630
        %v632 = vrot.slane %v631, 1
        %v633 = vadd.f32 %v631, %v632
        %v634 = vadd.f32 %v627, %v633
        %635 = vst [vmem:[#allocation11] sm:$0x1] %v634
        %v636 = vld [vmem:[#allocation13] sm:$0x1]
        %v637 = vmul.f32 %v616, %v616
        %v638 = vrot.slane %v637, 4
        %v639 = vadd.f32 %v637, %v638
        %v640 = vrot.slane %v639, 2
        %v641 = vadd.f32 %v639, %v640
        %v642 = vrot.slane %v641, 1
        %v643 = vadd.f32 %v641, %v642
        %v644 = vadd.f32 %v636, %v643
        %645 = vst [vmem:[#allocation13] sm:$0x1] %v644
        %v647 = vcombine.high %v616, %v616
        %v649 = vunpack.c.l.s4 1966171168
        %v650 = vunpack.c.0.s8 %v649
        %v651 = vlaneseq
        %v652 = vshrl.u32 %v651, 7
        %v653 = vsub.s32 %v650, %v652
        %v654 = vrot.slane %v616, %v653
        %v656 = vunpack.c.l.s4 1966171168
        %v657 = vunpack.c.0.s8 %v656
        %v658 = vlaneseq
        %v659 = vshrl.u32 %v658, 7
        %v660 = vsub.s32 %v657, %v659
        %v661 = vrot.slane %v647, %v660
        %v662 = vcombine.high %v654, %v654
        %v663 = vcombine.high %v661, %v661
        %v665 = vunpack.c.l.s4 1966171168
        %v666 = vunpack.c.0.s8 %v665
        %v667 = vlaneseq
        %v668 = vshrl.u32 %v667, 7
        %v669 = vsub.s32 %v666, %v668
        %v670 = vrot.slane %v654, %v669
        %v672 = vunpack.c.l.s4 1966171168
        %v673 = vunpack.c.0.s8 %v672
        %v674 = vlaneseq
        %v675 = vshrl.u32 %v674, 7
        %v676 = vsub.s32 %v673, %v675
        %v677 = vrot.slane %v661, %v676
        %v679 = vunpack.c.l.s4 1966171168
        %v680 = vunpack.c.0.s8 %v679
        %v681 = vlaneseq
        %v682 = vshrl.u32 %v681, 7
        %v683 = vsub.s32 %v680, %v682
        %v684 = vrot.slane %v662, %v683
        %v686 = vunpack.c.l.s4 1966171168
        %v687 = vunpack.c.0.s8 %v686
        %v688 = vlaneseq
        %v689 = vshrl.u32 %v688, 7
        %v690 = vsub.s32 %v687, %v689
        %v691 = vrot.slane %v663, %v690
        %v692 = vcombine.high %v670, %v670
        %v693 = vcombine.high %v677, %v677
        %v694 = vcombine.high %v684, %v684
        %v695 = vcombine.high %v691, %v691
        %704 = vst [vmem:[%s391] sm:$0x1] %v670
        %705 = vst [vmem:[%s391 + $0x1] sm:$0x1] %v684
        %706 = vst [vmem:[%s391 + $0x2] sm:$0x1] %v692
        %707 = vst [vmem:[%s391 + $0x3] sm:$0x1] %v694
        %708 = vst [vmem:[%s391 + $0x4] sm:$0x1] %v677
        %709 = vst [vmem:[%s391 + $0x5] sm:$0x1] %v691
        %710 = vst [vmem:[%s391 + $0x6] sm:$0x1] %v693
        %711 = vst [vmem:[%s391 + $0x7] sm:$0x1] %v695
        %s712 = sand.u32 %s172, 1
        %s713 = scalar_lea.sflag [#allocation4], %s712
        %s714 = sand.u32 %s172, 1
        %s715 = smul.addr %s714, 8
        %s716 = scalar_lea.vmem [#allocation10], %s715
        // Predicated region
        $region57: #{tpu_custom_call.1} parent=35 // pred_check
          %p717 = pneg %p182
        $region58: #{tpu_custom_call.1} parent=35 // pred_check_branch
          %719 = sbr.rel (%p717) target = $region60
        $region59: #{tpu_custom_call.1} parent=35 // pred_region
          %s720 = smul.u32 8, %s34
          %s722 = ssub.s32 128, 128
          %723 = vsyncadd %s713, %s722
          %s724 = smul.addr %s33, 16
          %s725 = sadd.s32 %s720, %s724
          %s726 = smul.addr %s725, 16
          %s727 = scalar_lea.hbm %s4, %s726
          %s728 = sshll.u32 %s716, 4
          %s729 = int_to_ptr.vmem [resolvable:$true] %s728
          %734 = dma.vmem_to_hbm [thread:$0]  %s729, 128, %s727, %s713, 16, 16, 1
        $region60: #{tpu_custom_call.1} parent=35 // pred_fallthru
          _
        // Predicated region
        $region61: #{tpu_custom_call.1} parent=35 // pred_check
          %p735 = pneg %p203
        $region62: #{tpu_custom_call.1} parent=35 // pred_check_branch
          %737 = sbr.rel (%p735) target = $region64
        $region63: #{tpu_custom_call.1} parent=35 // pred_region
          %s739 = ssub.s32 16, 16
          %740 = vsyncadd [#allocation12], %s739
          %s742 = sshll.u32 [#allocation11], 4
          %s743 = int_to_ptr.vmem [resolvable:$true] %s742
          %745 = dma.vmem_to_hbm [thread:$0]  %s743, 16, %s5, [#allocation12]
        $region64: #{tpu_custom_call.1} parent=35 // pred_fallthru
          _
        // Predicated region
        $region65: #{tpu_custom_call.1} parent=35 // pred_check
          %p746 = pneg %p224
        $region66: #{tpu_custom_call.1} parent=35 // pred_check_branch
          %748 = sbr.rel (%p746) target = $region68
        $region67: #{tpu_custom_call.1} parent=35 // pred_region
          %s750 = ssub.s32 16, 16
          %751 = vsyncadd [#allocation12], %s750
          %s753 = sshll.u32 [#allocation13], 4
          %s754 = int_to_ptr.vmem [resolvable:$true] %s753
          %756 = dma.vmem_to_hbm [thread:$0]  %s754, 16, %s6, [#allocation12]
        $region68: #{tpu_custom_call.1} parent=35 // pred_fallthru
          _
        // Predicated region
        $region69: #{tpu_custom_call.1} parent=35 // pred_check
          %p757 = pneg %p203
        $region70: #{tpu_custom_call.1} parent=35 // pred_check_branch
          %759 = sbr.rel (%p757) target = $region72
        $region71: #{tpu_custom_call.1} parent=35 // pred_region
          %760 = dma.done [#allocation12], 16
        $region72: #{tpu_custom_call.1} parent=35 // pred_fallthru
          _
        // Predicated region
        $region73: #{tpu_custom_call.1} parent=35 // pred_check
          %p761 = pneg %p224
        $region74: #{tpu_custom_call.1} parent=35 // pred_check_branch
          %763 = sbr.rel (%p761) target = $region76
        $region75: #{tpu_custom_call.1} parent=35 // pred_region
          %764 = dma.done [#allocation12], 16
        $region76: #{tpu_custom_call.1} parent=35 // pred_fallthru
          _
      $region36: #{tpu_custom_call.1} parent=5 // pred_fallthru
        _
      %p765 = scmp.le.s32.totalorder 2, %s24
      // Predicated region
      $region77: #{tpu_custom_call.1} parent=5 // pred_check
        %p766 = pneg %p765
      $region78: #{tpu_custom_call.1} parent=5 // pred_check_branch
        %768 = sbr.rel (%p766) target = $region80
      $region79: #{tpu_custom_call.1} parent=5 // pred_region
        %s769 = ssub.s32 %s24, 2
        // Predicated region
        $region81: #{tpu_custom_call.1} parent=79 // pred_check
          %p770 = pneg %p188
        $region82: #{tpu_custom_call.1} parent=79 // pred_check_branch
          %772 = sbr.rel (%p770) target = $region84
        $region83: #{tpu_custom_call.1} parent=79 // pred_region
          %s773 = sand.u32 %s173, 1
          %s774 = scalar_lea.sflag [#allocation4], %s773
          %s775 = sand.u32 %s173, 1
          %s776 = smul.addr %s775, 8
          %s777 = scalar_lea.vmem [#allocation10], %s776
          %778 = dma.done %s774, 128
        $region84: #{tpu_custom_call.1} parent=79 // pred_fallthru
          _
      $region80: #{tpu_custom_call.1} parent=5 // pred_fallthru
        _
    $region6: #{tpu_custom_call.1} parent=1 // loop_footer
      %s28 = sadd.s32 1, %s24
    $region7: #{tpu_custom_call.1} parent=1 // loop_footer_branch
      %23 = sbr.rel target = $region3
    $region8: #{tpu_custom_call.1} parent=1 // loop_exit
      _
    %779 = vsyncpa [#allocation3], 1
    %s780 = scalar_lea.sflag [#allocation3], 1
    %781 = vsyncpa %s780, 1
    %782 = vsyncpa [#allocation6], 1
    %s783 = scalar_lea.sflag [#allocation6], 1
    %784 = vsyncpa %s783, 1
    %785 = vsyncpa [#allocation9], 1
    %786 = vsyncpa [#allocation4], 1
    %s787 = scalar_lea.sflag [#allocation4], 1
    %788 = vsyncpa %s787, 1
    %789 = vsyncpa [#allocation12], 1

</llo_original>
